<compile_context>
chip_gen: v6e
topology: v6e:2x2x1
jax: 0.10.0
libtpu: 0.0.40
codegen_flags: <defaults>
</compile_context>

<pallas_src>
from functools import partial

import jax
import jax.numpy as jnp
from jax.experimental import pallas as pl
from jax.experimental.pallas import tpu as pltpu

HIDDEN = 64
FUSED = 2 * HIDDEN       # 128 : critic half | actor half
OUT_LANES = 128          # lane-dense packed output width
MAX_BATCH_TILE = 512     # rows per grid step for large batches


def _round_up(n, m):
    return ((n + m - 1) // m) * m


def _mlp_fused_kernel(x_ref, p_ref, out_ref, *, s_pad, compute_dtype):
    """One fused forward pass tile: 3 wide MXU matmuls + 2 tanh, all in VMEM."""
    x = x_ref[...]                                            # (TB, S_pad) f32

    # Static slices into the single packed parameter block (all 128 lanes wide).
    w1 = p_ref[0:s_pad, :]                                    # (S_pad, 128)
    w2 = p_ref[s_pad:s_pad + FUSED, :]                        # (128, 128)
    wo = p_ref[s_pad + FUSED:s_pad + 2 * FUSED, :]            # (128, 128)
    bias = p_ref[s_pad + 2 * FUSED:s_pad + 2 * FUSED + 8, :]  # (8, 128)
    b1 = bias[0:1, :]
    b2 = bias[1:2, :]
    bo = bias[2:3, :]

    # Layer 1 (critic | actor fused along lanes).
    h = jnp.tanh(
        jnp.dot(x.astype(compute_dtype), w1.astype(compute_dtype),
                preferred_element_type=jnp.float32) + b1)
    # Layer 2 (block-diagonal -> branches stay independent).
    h = jnp.tanh(
        jnp.dot(h.astype(compute_dtype), w2.astype(compute_dtype),
                preferred_element_type=jnp.float32) + b2)
    # Output heads packed lane-dense: lane 0 = value, lanes 1..A = mean.
    out_ref[...] = (
        jnp.dot(h.astype(compute_dtype), wo.astype(compute_dtype),
                preferred_element_type=jnp.float32) + bo)


def pack_params(p, state_size):
    """One-time packing of the 13 small tensors into a single (S_pad+264, 128)
    f32 array, plus the x-independent sigma = exp(sigma_log)."""
    s_pad = _round_up(max(state_size, 8), 8)
    A = p["wm"].shape[1]
    assert 1 + A <= OUT_LANES, "num_actions too large for packed output lanes"

    w1 = jnp.zeros((s_pad, FUSED), jnp.float32)
    w1 = w1.at[:state_size, :HIDDEN].set(p["w1v"])
    w1 = w1.at[:state_size, HIDDEN:].set(p["w1a"])

    w2 = jnp.zeros((FUSED, FUSED), jnp.float32)
    w2 = w2.at[:HIDDEN, :HIDDEN].set(p["w2v"])
    w2 = w2.at[HIDDEN:, HIDDEN:].set(p["w2a"])

    wo = jnp.zeros((FUSED, OUT_LANES), jnp.float32)
    wo = wo.at[:HIDDEN, 0:1].set(p["wv"])
    wo = wo.at[HIDDEN:, 1:1 + A].set(p["wm"])

    bias = jnp.zeros((8, OUT_LANES), jnp.float32)
    bias = bias.at[0, :HIDDEN].set(p["b1v"][0])
    bias = bias.at[0, HIDDEN:].set(p["b1a"][0])
    bias = bias.at[1, :HIDDEN].set(p["b2v"][0])
    bias = bias.at[1, HIDDEN:].set(p["b2a"][0])
    bias = bias.at[2, 0].set(p["bv"][0, 0])
    bias = bias.at[2, 1:1 + A].set(p["bm"][0])

    packed = jnp.concatenate([w1, w2, wo, bias], axis=0)      # (s_pad+264, 128)
    sigma = jnp.exp(p["sigma_log"])                           # (1, A), constant wrt x

    return dict(packed=packed, sigma=sigma, s_pad=s_pad,
                state_size=state_size, num_actions=A)


def mlp_net_forward(x, packed_params, *, compute_dtype=jnp.float32):
    """mlp_net 'gauss' forward as a single Pallas kernel.

    Returns (value, (mean, sigma)) matching the PyTorch module.
    Set compute_dtype=jnp.bfloat16 on v6e/v7x for MXU-native matmuls
    (accumulation stays f32; expect ~1e-2 relative tolerance vs. f32 ref).
    """
    B, S = x.shape
    s_pad = packed_params["s_pad"]
    A = packed_params["num_actions"]
    p_rows = s_pad + 2 * FUSED + 8

    # Batch tiling: small batches run as a single tile; large batches are split
    # into MAX_BATCH_TILE-row tiles on a "parallel" grid axis.
    if B <= MAX_BATCH_TILE:
        tb = max(8, _round_up(B, 8))
        b_pad = tb
    else:
        tb = MAX_BATCH_TILE
        b_pad = _round_up(B, tb)
    grid = (b_pad // tb,)

    # Pad batch to the f32 sublane width and state dim to s_pad (zeros are
    # harmless: padded lanes/rows never reach the real output slots).
    x_p = jnp.zeros((b_pad, s_pad), jnp.float32).at[:B, :S].set(x)

    out = pl.pallas_call(
        partial(_mlp_fused_kernel, s_pad=s_pad, compute_dtype=compute_dtype),
        out_shape=jax.ShapeDtypeStruct((b_pad, OUT_LANES), jnp.float32),
        grid_spec=pltpu.PrefetchScalarGridSpec(
            num_scalar_prefetch=0,
            grid=grid,
            in_specs=[
                pl.BlockSpec((tb, s_pad), lambda i: (i, 0)),
                # Params: same block for every grid step -> stays VMEM-resident.
                pl.BlockSpec((p_rows, OUT_LANES), lambda i: (0, 0)),
            ],
            out_specs=pl.BlockSpec((tb, OUT_LANES), lambda i: (i, 0)),
        ),
        compiler_params=pltpu.CompilerParams(
            dimension_semantics=("parallel",)),
    )(x_p, packed_params["packed"])

    value = out[:B, 0:1]
    mean = out[:B, 1:1 + A]
    sigma = jnp.broadcast_to(packed_params["sigma"], (B, A))
    return value, (mean, sigma)


def init_params(key, state_size, num_actions, hidden=HIDDEN):
    """Deterministic init mimicking PyTorch nn.Linear default
    (U(-1/sqrt(fan_in), 1/sqrt(fan_in))) plus the module's weight.mul_(0.1) /
    bias.zero_() tweaks. Weights stored transposed as (in_features, out_features)."""
    def linear(k, fan_in, fan_out, w_scale=1.0, zero_bias=False):
        kw, kb = jax.random.split(k)
        bound = 1.0 / jnp.sqrt(fan_in)
        w = jax.random.uniform(kw, (fan_in, fan_out), jnp.float32, -bound, bound) * w_scale
        if zero_bias:
            b = jnp.zeros((1, fan_out), jnp.float32)
        else:
            b = jax.random.uniform(kb, (1, fan_out), jnp.float32, -bound, bound)
        return w, b

    keys = jax.random.split(key, 6)
    w1v, b1v = linear(keys[0], state_size, hidden)
    w2v, b2v = linear(keys[1], hidden, hidden)
    w1a, b1a = linear(keys[2], state_size, hidden)
    w2a, b2a = linear(keys[3], hidden, hidden)
    wm, bm = linear(keys[4], hidden, num_actions, w_scale=0.1, zero_bias=True)
    wv, bv = linear(keys[5], hidden, 1, w_scale=0.1, zero_bias=True)
    sigma_log = jnp.zeros((1, num_actions), jnp.float32)

    return dict(w1v=w1v, b1v=b1v, w2v=w2v, b2v=b2v,
                w1a=w1a, b1a=b1a, w2a=w2a, b2a=b2a,
                wm=wm, bm=bm, wv=wv, bv=bv, sigma_log=sigma_log)


def mlp_net_ref(x, p):
    """Pure-JAX reference for correctness checking."""
    xv = jnp.tanh(x @ p["w1v"] + p["b1v"])
    xv = jnp.tanh(xv @ p["w2v"] + p["b2v"])
    value = xv @ p["wv"] + p["bv"]
    xa = jnp.tanh(x @ p["w1a"] + p["b1a"])
    xa = jnp.tanh(xa @ p["w2a"] + p["b2a"])
    mean = xa @ p["wm"] + p["bm"]
    sigma = jnp.exp(jnp.broadcast_to(p["sigma_log"], mean.shape))
    return value, (mean, sigma)


if __name__ == "__main__":
    B, S, A = 2, 16, 4  # batch, state_size, num_actions
    key = jax.random.PRNGKey(0)
    k_params, k_x = jax.random.split(key)

    params = init_params(k_params, S, A)
    x = jax.random.normal(k_x, (B, S), jnp.float32)

    packed = pack_params(params, S)
    value, (mean, sigma) = mlp_net_forward(x, packed)
    jax.block_until_ready((value, mean, sigma))

    v_ref, (m_ref, s_ref) = mlp_net_ref(x, params)
    assert value.shape == (B, 1) and mean.shape == (B, A) and sigma.shape == (B, A)
    assert jnp.allclose(value, v_ref, atol=1e-5), "value mismatch"
    assert jnp.allclose(mean, m_ref, atol=1e-5), "mean mismatch"
    assert jnp.allclose(sigma, s_ref, atol=1e-5), "sigma mismatch"

    # Exercise the tiled (multi-grid-step) path once as well.
    B2 = 1000
    x2 = jax.random.normal(jax.random.PRNGKey(1), (B2, S), jnp.float32)
    v2, (m2, s2) = mlp_net_forward(x2, packed)
    jax.block_until_ready((v2, m2, s2))
    v2r, (m2r, s2r) = mlp_net_ref(x2, params)
    assert jnp.allclose(v2, v2r, atol=1e-5), "tiled value mismatch"
    assert jnp.allclose(m2, m2r, atol=1e-5), "tiled mean mismatch"

    print("KERNEL_OK")
</pallas_src>

<mosaic_0001>
module attributes {stable_mosaic.version = 11 : i64} {
  func.func @_mlp_fused_kernel(%arg0: i32, %arg1: memref<8x16xf32, #tpu.memory_space<vmem>>, %arg2: memref<280x128xf32, #tpu.memory_space<vmem>>, %arg3: memref<8x128xf32, #tpu.memory_space<vmem>>) attributes {dimension_semantics = [#tpu.dimension_semantics<parallel>], iteration_bounds = array<i64: 1>, scalar_prefetch = 0 : i64, scratch_operands = 0 : i64, tpu.core_type = #tpu.core_type<tc>, window_params = [{transform_indices = @transform_0, window_bounds = array<i64: 8, 16>}, {pipeline_mode = #tpu.pipeline_mode<synchronous>, transform_indices = @transform_1, window_bounds = array<i64: 280, 128>}, {transform_indices = @transform_2, window_bounds = array<i64: 8, 128>}]} {
    %c0 = arith.constant 0 : index
    %c0_0 = arith.constant 0 : index
    %0 = vector.load %arg1[%c0, %c0_0] : memref<8x16xf32, #tpu.memory_space<vmem>>, vector<8x16xf32>
    %c0_1 = arith.constant 0 : index
    %c0_2 = arith.constant 0 : index
    %1 = vector.load %arg2[%c0_1, %c0_2] : memref<280x128xf32, #tpu.memory_space<vmem>>, vector<16x128xf32>
    %c16 = arith.constant 16 : index
    %c0_3 = arith.constant 0 : index
    %2 = vector.load %arg2[%c16, %c0_3] : memref<280x128xf32, #tpu.memory_space<vmem>>, vector<128x128xf32>
    %c144 = arith.constant 144 : index
    %c0_4 = arith.constant 0 : index
    %3 = vector.load %arg2[%c144, %c0_4] : memref<280x128xf32, #tpu.memory_space<vmem>>, vector<128x128xf32>
    %c272 = arith.constant 272 : index
    %c0_5 = arith.constant 0 : index
    %4 = vector.load %arg2[%c272, %c0_5] : memref<280x128xf32, #tpu.memory_space<vmem>>, vector<8x128xf32>
    %5 = vector.extract_strided_slice %4 {offsets = [0, 0], sizes = [1, 128], strides = [1, 1]} : vector<8x128xf32> to vector<1x128xf32>
    %6 = vector.extract_strided_slice %4 {offsets = [1, 0], sizes = [1, 128], strides = [1, 1]} : vector<8x128xf32> to vector<1x128xf32>
    %7 = vector.extract_strided_slice %4 {offsets = [2, 0], sizes = [1, 128], strides = [1, 1]} : vector<8x128xf32> to vector<1x128xf32>
    %cst = arith.constant dense<0.000000e+00> : vector<8x128xf32>
    %8 = tpu.matmul %0, %1, %cst {dimension_numbers = #tpu.dot_dimension_numbers<[1], [0], [0], [1], [0, 0, 1, 1], [], []>} : vector<8x16xf32>, vector<16x128xf32>, vector<8x128xf32> -> vector<8x128xf32>
    %9 = vector.broadcast %5 : vector<1x128xf32> to vector<8x128xf32>
    %10 = arith.addf %8, %9 : vector<8x128xf32>
    %11 = math.tanh %10 : vector<8x128xf32>
    %cst_6 = arith.constant dense<0.000000e+00> : vector<8x128xf32>
    %12 = tpu.matmul %11, %2, %cst_6 {dimension_numbers = #tpu.dot_dimension_numbers<[1], [0], [0], [1], [0, 0, 1, 1], [], []>} : vector<8x128xf32>, vector<128x128xf32>, vector<8x128xf32> -> vector<8x128xf32>
    %13 = vector.broadcast %6 : vector<1x128xf32> to vector<8x128xf32>
    %14 = arith.addf %12, %13 : vector<8x128xf32>
    %15 = math.tanh %14 : vector<8x128xf32>
    %cst_7 = arith.constant dense<0.000000e+00> : vector<8x128xf32>
    %16 = tpu.matmul %15, %3, %cst_7 {dimension_numbers = #tpu.dot_dimension_numbers<[1], [0], [0], [1], [0, 0, 1, 1], [], []>} : vector<8x128xf32>, vector<128x128xf32>, vector<8x128xf32> -> vector<8x128xf32>
    %17 = vector.broadcast %7 : vector<1x128xf32> to vector<8x128xf32>
    %18 = arith.addf %16, %17 : vector<8x128xf32>
    %c0_8 = arith.constant 0 : index
    %c0_9 = arith.constant 0 : index
    %19 = vector.load %arg3[%c0_8, %c0_9] : memref<8x128xf32, #tpu.memory_space<vmem>>, vector<8x128xf32>
    tpu.vector_store %arg3[%c0_8, %c0_9], %18 {strides = array<i32>} : memref<8x128xf32, #tpu.memory_space<vmem>>, vector<8x128xf32>,
    return
  }
  func.func @transform_0(%arg0: i32) -> (i32, i32) {
    %c0_i32 = arith.constant 0 : i32
    %c0_i32_0 = arith.constant 0 : i32
    return %arg0, %c0_i32 : i32, i32
  }
  func.func @transform_1(%arg0: i32) -> (i32, i32) {
    %c0_i32 = arith.constant 0 : i32
    %c0_i32_0 = arith.constant 0 : i32
    %c0_i32_1 = arith.constant 0 : i32
    return %c0_i32, %c0_i32_0 : i32, i32
  }
  func.func @transform_2(%arg0: i32) -> (i32, i32) {
    %c0_i32 = arith.constant 0 : i32
    %c0_i32_0 = arith.constant 0 : i32
    return %arg0, %c0_i32 : i32, i32
  }
}

</mosaic_0001>

<llo_original>
// kernel: tpu_custom_call.1
$region0: #{tpu_custom_call.1}
  #allocation0 [shape = 'u32[]', space=smem, size = 0x4, offset = 0x4, fixed_abs, tag = 'smem constant byte address 0x4 - core index']
  #allocation1 [shape = 'u32[144,128]{1,0:T(1,128)}', space=vmem, size = 0x12000, scoped, tag = 'internal scratch']
  %s0 = inlined_call_operand.hbm [shape: f32[8,16], index: 0, kind: input, shape index: {}]
  %s1 = inlined_call_operand.hbm [shape: f32[280,128], index: 1, kind: input, shape index: {}]
  %s2 = inlined_call_operand.hbm [shape: f32[8,128], index: 2, kind: output, shape index: {}]
  %s3 = sld [smem:[#allocation0]]
  $region26: #{tpu_custom_call.1} parent=0
    _
  %s5 = ssub.s32 1, %s3
  %s6 = scalar_select 0, %s5, %s3
  $region1: #{tpu_custom_call.1} parent=0
    #allocation2 [shape = 'u8[4096]{0}', space=vmem, size = 0x1000, scoped, tag = 'input window, operand 0, single buffered']
    #allocation3 [shape = 's32[1]{0}', space=sflag, size = 0x4, scoped, tag = 'scoped memory for tpu_custom_call.1']
    #allocation4 [shape = 's32[1]{0}', space=sflag, size = 0x4, scoped, tag = 'scoped memory for tpu_custom_call.1']
    #allocation5 [shape = 'u8[143360]{0}', space=vmem, size = 0x23000, scoped, tag = 'input window, operand 1, single buffered']
    #allocation6 [shape = 's32[1]{0}', space=sflag, size = 0x4, scoped, tag = 'scoped memory for tpu_custom_call.1']
    #allocation7 [shape = 'u8[4096]{0}', space=vmem, size = 0x1000, scoped, tag = 'output window, operand 0, single buffered']
    %7 = vsyncpa [#allocation3], 0
    %8 = vsyncpa [#allocation6], 0
    %9 = vsyncpa [#allocation4], 0
    // Predicated region
    $region2: #{tpu_custom_call.1} parent=1 // pred_check
      _
    $region3: #{tpu_custom_call.1} parent=1 // pred_check_branch
      %11 = sbr.rel (0) target = $region5
    $region4: #{tpu_custom_call.1} parent=1 // pred_region
      %s13 = ssub.s32 128, 128
      %14 = vsyncadd [#allocation3], %s13
      %s16 = sshll.u32 [#allocation2], 4
      %s17 = int_to_ptr.vmem [resolvable:$true] %s16
      %19 = dma.hbm_to_vmem [thread:$0]  %s0, 128, %s17, [#allocation3]
    $region5: #{tpu_custom_call.1} parent=1 // pred_fallthru
      _
    // Predicated region
    $region6: #{tpu_custom_call.1} parent=1 // pred_check
      _
    $region7: #{tpu_custom_call.1} parent=1 // pred_check_branch
      %21 = sbr.rel (0) target = $region9
    $region8: #{tpu_custom_call.1} parent=1 // pred_region
      %s23 = ssub.s32 4480, 4480
      %24 = vsyncadd [#allocation6], %s23
      %s25 = sshll.u32 [#allocation5], 4
      %s26 = int_to_ptr.vmem [resolvable:$true] %s25
      %31 = dma.hbm_to_vmem [thread:$0]  %s1, 4480, %s26, [#allocation6], 128, 128, 8
    $region9: #{tpu_custom_call.1} parent=1 // pred_fallthru
      _
    // Predicated region
    $region10: #{tpu_custom_call.1} parent=1 // pred_check
      _
    $region11: #{tpu_custom_call.1} parent=1 // pred_check_branch
      %33 = sbr.rel (0) target = $region13
    $region12: #{tpu_custom_call.1} parent=1 // pred_region
      %34 = dma.done [#allocation3], 128
    $region13: #{tpu_custom_call.1} parent=1 // pred_fallthru
      _
    // Predicated region
    $region14: #{tpu_custom_call.1} parent=1 // pred_check
      _
    $region15: #{tpu_custom_call.1} parent=1 // pred_check_branch
      %36 = sbr.rel (0) target = $region17
    $region16: #{tpu_custom_call.1} parent=1 // pred_region
      %37 = dma.done [#allocation6], 4480
    $region17: #{tpu_custom_call.1} parent=1 // pred_fallthru
      _
    %v38 = vld [vmem:[#allocation2] sm:$0xff]
    %v39 = vld [vmem:[#allocation5] sm:$0xff]
    %v40 = vld [vmem:[#allocation5 + $0x8] sm:$0xff]
    %v41 = vld [vmem:[#allocation5 + $0x10] sm:$0xff]
    %v42 = vld [vmem:[#allocation5 + $0x18] sm:$0xff]
    %v43 = vld [vmem:[#allocation5 + $0x20] sm:$0xff]
    %v44 = vld [vmem:[#allocation5 + $0x28] sm:$0xff]
    %v45 = vld [vmem:[#allocation5 + $0x30] sm:$0xff]
    %v46 = vld [vmem:[#allocation5 + $0x38] sm:$0xff]
    %v47 = vld [vmem:[#allocation5 + $0x40] sm:$0xff]
    %v48 = vld [vmem:[#allocation5 + $0x48] sm:$0xff]
    %v49 = vld [vmem:[#allocation5 + $0x50] sm:$0xff]
    %v50 = vld [vmem:[#allocation5 + $0x58] sm:$0xff]
    %v51 = vld [vmem:[#allocation5 + $0x60] sm:$0xff]
    %v52 = vld [vmem:[#allocation5 + $0x68] sm:$0xff]
    %v53 = vld [vmem:[#allocation5 + $0x70] sm:$0xff]
    %v54 = vld [vmem:[#allocation5 + $0x78] sm:$0xff]
    %v55 = vld [vmem:[#allocation5 + $0x80] sm:$0xff]
    %v56 = vld [vmem:[#allocation5 + $0x88] sm:$0xff]
    %v57 = vld [vmem:[#allocation5 + $0x90] sm:$0xff]
    %v58 = vld [vmem:[#allocation5 + $0x98] sm:$0xff]
    %v59 = vld [vmem:[#allocation5 + $0xa0] sm:$0xff]
    %v60 = vld [vmem:[#allocation5 + $0xa8] sm:$0xff]
    %v61 = vld [vmem:[#allocation5 + $0xb0] sm:$0xff]
    %v62 = vld [vmem:[#allocation5 + $0xb8] sm:$0xff]
    %v63 = vld [vmem:[#allocation5 + $0xc0] sm:$0xff]
    %v64 = vld [vmem:[#allocation5 + $0xc8] sm:$0xff]
    %v65 = vld [vmem:[#allocation5 + $0xd0] sm:$0xff]
    %v66 = vld [vmem:[#allocation5 + $0xd8] sm:$0xff]
    %v67 = vld [vmem:[#allocation5 + $0xe0] sm:$0xff]
    %v68 = vld [vmem:[#allocation5 + $0xe8] sm:$0xff]
    %v69 = vld [vmem:[#allocation5 + $0xf0] sm:$0xff]
    %v70 = vld [vmem:[#allocation5 + $0xf8] sm:$0xff]
    %v71 = vld [vmem:[#allocation5 + $0x100] sm:$0xff]
    %v72 = vld [vmem:[#allocation5 + $0x108] sm:$0xff]
    %v73 = vld [vmem:[#allocation5 + $0x110] sm:$0xff]
    %v74 = vlaneseq
    %v75 = vshrl.u32 %v74, 7
    %v76 = vsub.s32 0, %v75
    %v77 = vrot.slane %v73, %v76
    %vm78 = vcmask 130048
    %v80 = vsel %vm78, %v38, 0
    %82 = vmatprep.subr.mxu0 0.0
    %83 = vmatpush1.msra.mxu0 0.0
    %84 = vmatprep.subr.mxu0 0.0
    %85 = vmatpush1.msra.mxu0 0.0
    %86 = vmatprep.subr.mxu0 0.0
    %87 = vmatpush1.msra.mxu0 0.0
    %88 = vmatprep.subr.mxu0 0.0
    %89 = vmatpush1.msra.mxu0 0.0
    %90 = vmatprep.subr.mxu0 0.0
    %91 = vmatpush1.msra.mxu0 0.0
    %92 = vmatprep.subr.mxu0 0.0
    %93 = vmatpush1.msra.mxu0 0.0
    %94 = vmatprep.subr.mxu0 0.0
    %95 = vmatpush1.msra.mxu0 0.0
    %96 = vmatprep.subr.mxu0 0.0
    %97 = vmatpush1.msra.mxu0 0.0
    %98 = vmatprep.subr.mxu0 0.0
    %99 = vmatpush1.msra.mxu0 0.0
    %100 = vmatprep.subr.mxu0 0.0
    %101 = vmatpush1.msra.mxu0 0.0
    %102 = vmatprep.subr.mxu0 0.0
    %103 = vmatpush1.msra.mxu0 0.0
    %104 = vmatprep.subr.mxu0 0.0
    %105 = vmatpush1.msra.mxu0 0.0
    %106 = vmatprep.subr.mxu0 0.0
    %107 = vmatpush1.msra.mxu0 0.0
    %108 = vmatprep.subr.mxu0 0.0
    %109 = vmatpush1.msra.mxu0 0.0
    %110 = vmatprep.subr.mxu0 0.0
    %111 = vmatpush1.msra.mxu0 %v40
    %112 = vmatprep.subr.mxu0 0.0
    %113 = vmatpush1.msra.mxu0 %v39
    %114 = vmatprep.subr.mxu0 0.0
    %115 = vmatpush2.msra.mxu0 0.0
    %116 = vmatprep.subr.mxu0 0.0
    %117 = vmatpush2.msra.mxu0 0.0
    %118 = vmatprep.subr.mxu0 0.0
    %119 = vmatpush2.msra.mxu0 0.0
    %120 = vmatprep.subr.mxu0 0.0
    %121 = vmatpush2.msra.mxu0 0.0
    %122 = vmatprep.subr.mxu0 0.0
    %123 = vmatpush2.msra.mxu0 0.0
    %124 = vmatprep.subr.mxu0 0.0
    %125 = vmatpush2.msra.mxu0 0.0
    %126 = vmatprep.subr.mxu0 0.0
    %127 = vmatpush2.msra.mxu0 0.0
    %128 = vmatprep.subr.mxu0 0.0
    %129 = vmatpush2.msra.mxu0 0.0
    %130 = vmatprep.subr.mxu0 0.0
    %131 = vmatpush2.msra.mxu0 0.0
    %132 = vmatprep.subr.mxu0 0.0
    %133 = vmatpush2.msra.mxu0 0.0
    %134 = vmatprep.subr.mxu0 0.0
    %135 = vmatpush2.msra.mxu0 0.0
    %136 = vmatprep.subr.mxu0 0.0
    %137 = vmatpush2.msra.mxu0 0.0
    %138 = vmatprep.subr.mxu0 0.0
    %139 = vmatpush2.msra.mxu0 0.0
    %140 = vmatprep.subr.mxu0 0.0
    %141 = vmatpush2.msra.mxu0 0.0
    %142 = vmatprep.subr.mxu0 0.0
    %143 = vmatpush2.msra.mxu0 0.0
    %144 = vmatprep.subr.mxu0 0.0
    %145 = vmatpush2.msra.mxu0 0.0
    %146 = vmatprep.mubr.f32.mxu0 0.0
    %147 = vmatmul.mubr.f32.gmra.mxu0 %v80
    %v148 = vpop.f32.mrf.mxu0
    %v149 = vadd.f32 %v77, %v148
    %v150 = vpop.f32.mrf.mxu0
    %151 = vdwg.mxu0
    %v152 = vtanh.pop %v149
    %v153 = vlaneseq
    %v154 = vshrl.u32 %v153, 7
    %v155 = vsub.s32 1, %v154
    %v156 = vrot.slane %v73, %v155
    %157 = vmatprep.subr.mxu0 0.0
    %158 = vmatpush1.msra.mxu0 %v56
    %159 = vmatprep.subr.mxu0 0.0
    %160 = vmatpush1.msra.mxu0 %v55
    %161 = vmatprep.subr.mxu0 0.0
    %162 = vmatpush1.msra.mxu0 %v54
    %163 = vmatprep.subr.mxu0 0.0
    %164 = vmatpush1.msra.mxu0 %v53
    %165 = vmatprep.subr.mxu0 0.0
    %166 = vmatpush1.msra.mxu0 %v52
    %167 = vmatprep.subr.mxu0 0.0
    %168 = vmatpush1.msra.mxu0 %v51
    %169 = vmatprep.subr.mxu0 0.0
    %170 = vmatpush1.msra.mxu0 %v50
    %171 = vmatprep.subr.mxu0 0.0
    %172 = vmatpush1.msra.mxu0 %v49
    %173 = vmatprep.subr.mxu0 0.0
    %174 = vmatpush1.msra.mxu0 %v48
    %175 = vmatprep.subr.mxu0 0.0
    %176 = vmatpush1.msra.mxu0 %v47
    %177 = vmatprep.subr.mxu0 0.0
    %178 = vmatpush1.msra.mxu0 %v46
    %179 = vmatprep.subr.mxu0 0.0
    %180 = vmatpush1.msra.mxu0 %v45
    %181 = vmatprep.subr.mxu0 0.0
    %182 = vmatpush1.msra.mxu0 %v44
    %183 = vmatprep.subr.mxu0 0.0
    %184 = vmatpush1.msra.mxu0 %v43
    %185 = vmatprep.subr.mxu0 0.0
    %186 = vmatpush1.msra.mxu0 %v42
    %187 = vmatprep.subr.mxu0 0.0
    %188 = vmatpush1.msra.mxu0 %v41
    %189 = vmatprep.subr.mxu0 0.0
    %190 = vmatpush2.msra.mxu0 0.0
    %191 = vmatprep.subr.mxu0 0.0
    %192 = vmatpush2.msra.mxu0 0.0
    %193 = vmatprep.subr.mxu0 0.0
    %194 = vmatpush2.msra.mxu0 0.0
    %195 = vmatprep.subr.mxu0 0.0
    %196 = vmatpush2.msra.mxu0 0.0
    %197 = vmatprep.subr.mxu0 0.0
    %198 = vmatpush2.msra.mxu0 0.0
    %199 = vmatprep.subr.mxu0 0.0
    %200 = vmatpush2.msra.mxu0 0.0
    %201 = vmatprep.subr.mxu0 0.0
    %202 = vmatpush2.msra.mxu0 0.0
    %203 = vmatprep.subr.mxu0 0.0
    %204 = vmatpush2.msra.mxu0 0.0
    %205 = vmatprep.subr.mxu0 0.0
    %206 = vmatpush2.msra.mxu0 0.0
    %207 = vmatprep.subr.mxu0 0.0
    %208 = vmatpush2.msra.mxu0 0.0
    %209 = vmatprep.subr.mxu0 0.0
    %210 = vmatpush2.msra.mxu0 0.0
    %211 = vmatprep.subr.mxu0 0.0
    %212 = vmatpush2.msra.mxu0 0.0
    %213 = vmatprep.subr.mxu0 0.0
    %214 = vmatpush2.msra.mxu0 0.0
    %215 = vmatprep.subr.mxu0 0.0
    %216 = vmatpush2.msra.mxu0 0.0
    %217 = vmatprep.subr.mxu0 0.0
    %218 = vmatpush2.msra.mxu0 0.0
    %219 = vmatprep.subr.mxu0 0.0
    %220 = vmatpush2.msra.mxu0 0.0
    %221 = vmatprep.mubr.f32.mxu0 0.0
    %222 = vmatmul.mubr.f32.gmra.mxu0 %v152
    %v223 = vpop.f32.mrf.mxu0
    %v224 = vadd.f32 %v156, %v223
    %v225 = vpop.f32.mrf.mxu0
    %226 = vdwg.mxu0
    %v227 = vtanh.pop %v224
    %v228 = vlaneseq
    %v229 = vshrl.u32 %v228, 7
    %v230 = vsub.s32 2, %v229
    %v231 = vrot.slane %v73, %v230
    %232 = vmatprep.subr.mxu0 0.0
    %233 = vmatpush1.msra.mxu0 %v72
    %234 = vmatprep.subr.mxu0 0.0
    %235 = vmatpush1.msra.mxu0 %v71
    %236 = vmatprep.subr.mxu0 0.0
    %237 = vmatpush1.msra.mxu0 %v70
    %238 = vmatprep.subr.mxu0 0.0
    %239 = vmatpush1.msra.mxu0 %v69
    %240 = vmatprep.subr.mxu0 0.0
    %241 = vmatpush1.msra.mxu0 %v68
    %242 = vmatprep.subr.mxu0 0.0
    %243 = vmatpush1.msra.mxu0 %v67
    %244 = vmatprep.subr.mxu0 0.0
    %245 = vmatpush1.msra.mxu0 %v66
    %246 = vmatprep.subr.mxu0 0.0
    %247 = vmatpush1.msra.mxu0 %v65
    %248 = vmatprep.subr.mxu0 0.0
    %249 = vmatpush1.msra.mxu0 %v64
    %250 = vmatprep.subr.mxu0 0.0
    %251 = vmatpush1.msra.mxu0 %v63
    %252 = vmatprep.subr.mxu0 0.0
    %253 = vmatpush1.msra.mxu0 %v62
    %254 = vmatprep.subr.mxu0 0.0
    %255 = vmatpush1.msra.mxu0 %v61
    %256 = vmatprep.subr.mxu0 0.0
    %257 = vmatpush1.msra.mxu0 %v60
    %258 = vmatprep.subr.mxu0 0.0
    %259 = vmatpush1.msra.mxu0 %v59
    %260 = vmatprep.subr.mxu0 0.0
    %261 = vmatpush1.msra.mxu0 %v58
    %262 = vmatprep.subr.mxu0 0.0
    %263 = vmatpush1.msra.mxu0 %v57
    %264 = vmatprep.subr.mxu0 0.0
    %265 = vmatpush2.msra.mxu0 0.0
    %266 = vmatprep.subr.mxu0 0.0
    %267 = vmatpush2.msra.mxu0 0.0
    %268 = vmatprep.subr.mxu0 0.0
    %269 = vmatpush2.msra.mxu0 0.0
    %270 = vmatprep.subr.mxu0 0.0
    %271 = vmatpush2.msra.mxu0 0.0
    %272 = vmatprep.subr.mxu0 0.0
    %273 = vmatpush2.msra.mxu0 0.0
    %274 = vmatprep.subr.mxu0 0.0
    %275 = vmatpush2.msra.mxu0 0.0
    %276 = vmatprep.subr.mxu0 0.0
    %277 = vmatpush2.msra.mxu0 0.0
    %278 = vmatprep.subr.mxu0 0.0
    %279 = vmatpush2.msra.mxu0 0.0
    %280 = vmatprep.subr.mxu0 0.0
    %281 = vmatpush2.msra.mxu0 0.0
    %282 = vmatprep.subr.mxu0 0.0
    %283 = vmatpush2.msra.mxu0 0.0
    %284 = vmatprep.subr.mxu0 0.0
    %285 = vmatpush2.msra.mxu0 0.0
    %286 = vmatprep.subr.mxu0 0.0
    %287 = vmatpush2.msra.mxu0 0.0
    %288 = vmatprep.subr.mxu0 0.0
    %289 = vmatpush2.msra.mxu0 0.0
    %290 = vmatprep.subr.mxu0 0.0
    %291 = vmatpush2.msra.mxu0 0.0
    %292 = vmatprep.subr.mxu0 0.0
    %293 = vmatpush2.msra.mxu0 0.0
    %294 = vmatprep.subr.mxu0 0.0
    %295 = vmatpush2.msra.mxu0 0.0
    %296 = vmatprep.mubr.f32.mxu0 0.0
    %297 = vmatmul.mubr.f32.gmra.mxu0 %v227
    %v298 = vpop.f32.mrf.mxu0
    %v299 = vadd.f32 %v231, %v298
    %v300 = vpop.f32.mrf.mxu0
    %301 = vdwg.mxu0
    %302 = vst [vmem:[#allocation7] sm:$0xff] %v299
    // Predicated region
    $region18: #{tpu_custom_call.1} parent=1 // pred_check
      _
    $region19: #{tpu_custom_call.1} parent=1 // pred_check_branch
      %304 = sbr.rel (0) target = $region21
    $region20: #{tpu_custom_call.1} parent=1 // pred_region
      %s306 = ssub.s32 128, 128
      %307 = vsyncadd [#allocation4], %s306
      %s309 = sshll.u32 [#allocation7], 4
      %s310 = int_to_ptr.vmem [resolvable:$true] %s309
      %312 = dma.vmem_to_hbm [thread:$0]  %s310, 128, %s2, [#allocation4]
    $region21: #{tpu_custom_call.1} parent=1 // pred_fallthru
      _
    // Predicated region
    $region22: #{tpu_custom_call.1} parent=1 // pred_check
      _
    $region23: #{tpu_custom_call.1} parent=1 // pred_check_branch
      %314 = sbr.rel (0) target = $region25
    $region24: #{tpu_custom_call.1} parent=1 // pred_region
      %315 = dma.done [#allocation4], 128
    $region25: #{tpu_custom_call.1} parent=1 // pred_fallthru
      _
    %316 = vsyncpa [#allocation3], 1
    %317 = vsyncpa [#allocation6], 1
    %318 = vsyncpa [#allocation4], 1

</llo_original>
